<compile_context>
chip_gen: v7x
topology: tpu7x:2x2x1
jax: 0.10.0
libtpu: 0.0.40
codegen_flags: <defaults>
</compile_context>

<pallas_src>
import jax
import jax.numpy as jnp
from jax.experimental import pallas as pl
from jax.experimental.pallas import tpu as pltpu

# True (unpadded) dims from the PyTorch module.
IN_F = 1
HID_F = 3
OUT_F = 5

LANE = 128           # samples per lane row
SUBLANE = 8          # sublane granularity
MAX_ROWS_PER_TILE = 512   # 512x128 f32 input tile = 256 KiB; output 1.25 MiB


def _generator_kernel(w1_ref, b1_ref, w2_ref, b2_ref, x_ref, o_ref):
    """Fused 1->3->5 MLP, batch-on-lanes.

    w1_ref: (HID_F,)        f32 SMEM   layer-1 weight (IN_F == 1, flattened)
    b1_ref: (HID_F,)        f32 SMEM   layer-1 bias
    w2_ref: (HID_F*OUT_F,)  f32 SMEM   layer-2 weight, row-major [h, f]
    b2_ref: (OUT_F,)        f32 SMEM   layer-2 bias
    x_ref : (ROWS, 128)     f32 VMEM   one sample scalar per element
    o_ref : (OUT_F, ROWS, 128) f32 VMEM  o[f, r, l] = feature f of sample (r, l)
    """
    x = x_ref[...]                                     # (ROWS, 128)

    # Layer 1: hidden_h = sigmoid(x * w1[h] + b1[h])   (VPU mul/add, EUP sigmoid)
    h = [jax.nn.sigmoid(x * w1_ref[j] + b1_ref[j]) for j in range(HID_F)]

    # Layer 2: out_f = sigmoid(sum_h hidden_h * w2[h, f] + b2[f])
    for f in range(OUT_F):
        z = h[0] * w2_ref[0 * OUT_F + f]
        for j in range(1, HID_F):
            z = z + h[j] * w2_ref[j * OUT_F + f]
        o_ref[f, :, :] = jax.nn.sigmoid(z + b2_ref[f])


def generator_forward(x, w1, b1, w2, b2, *, max_rows_per_tile=MAX_ROWS_PER_TILE):
    """x: (B, 1) f32.  Returns (B, 5) f32 = sigmoid(sigmoid(x@W1+b1)@W2+b2).

    w1: (IN_F, HID_F), b1: (HID_F,), w2: (HID_F, OUT_F), b2: (OUT_F,)
    (weights stored as (in, out) = PyTorch nn.Linear weight transposed).
    """
    x = jnp.asarray(x, jnp.float32)
    b = x.shape[0]

    # Tiny parameters -> flat f32 arrays for SMEM.
    w1_f = jnp.asarray(w1, jnp.float32).reshape(HID_F)
    b1_f = jnp.asarray(b1, jnp.float32).reshape(HID_F)
    w2_f = jnp.asarray(w2, jnp.float32).reshape(HID_F * OUT_F)   # [h*OUT_F + f]
    b2_f = jnp.asarray(b2, jnp.float32).reshape(OUT_F)

    # Batch-on-lanes layout: flatten the batch and pad (zeros) up to a whole
    # number of (rows_per_tile, 128) tiles.  Only the batch is padded.
    n_rows = max(1, pl.cdiv(b, LANE))
    n_rows8 = pl.cdiv(n_rows, SUBLANE) * SUBLANE
    rows_per_tile = min(max_rows_per_tile, n_rows8)
    n_rows_p = pl.cdiv(n_rows8, rows_per_tile) * rows_per_tile
    bp = n_rows_p * LANE
    n_tiles = n_rows_p // rows_per_tile

    x_flat = jnp.pad(x.reshape(b), (0, bp - b))
    x_tiles = x_flat.reshape(n_rows_p, LANE)

    smem_spec = pl.BlockSpec(memory_space=pltpu.MemorySpace.SMEM)

    out = pl.pallas_call(
        _generator_kernel,
        out_shape=jax.ShapeDtypeStruct((OUT_F, n_rows_p, LANE), jnp.float32),
        grid=(n_tiles,),
        in_specs=[
            smem_spec,                                           # w1
            smem_spec,                                           # b1
            smem_spec,                                           # w2
            smem_spec,                                           # b2
            pl.BlockSpec((rows_per_tile, LANE), lambda t: (t, 0)),   # x tile
        ],
        out_specs=pl.BlockSpec(
            (OUT_F, rows_per_tile, LANE), lambda t: (0, t, 0)
        ),
        compiler_params=pltpu.CompilerParams(
            dimension_semantics=("parallel",),
        ),
    )(w1_f, b1_f, w2_f, b2_f, x_tiles)

    # (OUT_F, rows, 128) -> (bp, OUT_F) -> slice true batch.  Cheap: true-size data.
    y = out.transpose(1, 2, 0).reshape(bp, OUT_F)[:b]
    return y


def _reference_forward(x, w1, b1, w2, b2):
    h = jax.nn.sigmoid(x @ w1 + b1)
    return jax.nn.sigmoid(h @ w2 + b2)


if __name__ == "__main__":
    key = jax.random.PRNGKey(0)
    k_x, k_w1, k_b1, k_w2, k_b2 = jax.random.split(key, 5)

    batch = 8
    # Deterministic synthetic parameters (shapes from nn.Linear(1,3), nn.Linear(3,5)),
    # stored as (in, out) = PyTorch weight transposed.
    w1 = jax.random.uniform(k_w1, (IN_F, HID_F), jnp.float32, -1.0, 1.0)
    b1 = jax.random.uniform(k_b1, (HID_F,), jnp.float32, -1.0, 1.0)
    w2 = jax.random.uniform(k_w2, (HID_F, OUT_F), jnp.float32, -1.0, 1.0)
    b2 = jax.random.uniform(k_b2, (OUT_F,), jnp.float32, -1.0, 1.0)

    # Input: the GAN generator is fed a random scalar seed per sample.
    x = jax.random.uniform(k_x, (batch, IN_F), jnp.float32)

    y = generator_forward(x, w1, b1, w2, b2)
    y = jax.block_until_ready(y)

    y_ref = _reference_forward(x, w1, b1, w2, b2)
    assert y.shape == (batch, OUT_F), y.shape
    assert jnp.allclose(y, y_ref, atol=1e-5, rtol=1e-5), "mismatch vs reference"

    # TODO(synk): train()/optimiser/plot_progress are host-side training utilities
    # (autograd + SGD + pandas plotting), not part of the forward pass kernel.

    print("KERNEL_OK")
</pallas_src>

<mosaic_0001>
module attributes {stable_mosaic.version = 11 : i64} {
  func.func @_generator_kernel(%arg0: i32, %arg1: memref<3xf32, #tpu.memory_space<smem>>, %arg2: memref<3xf32, #tpu.memory_space<smem>>, %arg3: memref<15xf32, #tpu.memory_space<smem>>, %arg4: memref<5xf32, #tpu.memory_space<smem>>, %arg5: memref<8x128xf32, #tpu.memory_space<vmem>>, %arg6: memref<5x8x128xf32, #tpu.memory_space<vmem>>) attributes {dimension_semantics = [#tpu.dimension_semantics<parallel>], iteration_bounds = array<i64: 1>, scalar_prefetch = 0 : i64, scratch_operands = 0 : i64, tpu.core_type = #tpu.core_type<tc>, window_params = [{transform_indices = @transform_0, window_bounds = array<i64: 3>}, {transform_indices = @transform_1, window_bounds = array<i64: 3>}, {transform_indices = @transform_2, window_bounds = array<i64: 15>}, {transform_indices = @transform_3, window_bounds = array<i64: 5>}, {transform_indices = @transform_4, window_bounds = array<i64: 8, 128>}, {transform_indices = @transform_5, window_bounds = array<i64: 5, 8, 128>}]} {
    %c0 = arith.constant 0 : index
    %c0_0 = arith.constant 0 : index
    %0 = vector.load %arg5[%c0, %c0_0] : memref<8x128xf32, #tpu.memory_space<vmem>>, vector<8x128xf32>
    %c0_1 = arith.constant 0 : index
    %1 = memref.load %arg1[%c0_1] : memref<3xf32, #tpu.memory_space<smem>>
    %2 = vector.broadcast %1 : f32 to vector<8x128xf32>
    %3 = arith.mulf %0, %2 : vector<8x128xf32>
    %c0_2 = arith.constant 0 : index
    %4 = memref.load %arg2[%c0_2] : memref<3xf32, #tpu.memory_space<smem>>
    %5 = vector.broadcast %4 : f32 to vector<8x128xf32>
    %6 = arith.addf %3, %5 : vector<8x128xf32>
    %7 = arith.negf %6 : vector<8x128xf32>
    %8 = math.exp %7 : vector<8x128xf32>
    %cst = arith.constant 1.000000e+00 : f32
    %9 = vector.broadcast %cst : f32 to vector<8x128xf32>
    %10 = arith.addf %9, %8 : vector<8x128xf32>
    %11 = arith.divf %9, %10 : vector<8x128xf32>
    %c1 = arith.constant 1 : index
    %12 = memref.load %arg1[%c1] : memref<3xf32, #tpu.memory_space<smem>>
    %13 = vector.broadcast %12 : f32 to vector<8x128xf32>
    %14 = arith.mulf %0, %13 : vector<8x128xf32>
    %c1_3 = arith.constant 1 : index
    %15 = memref.load %arg2[%c1_3] : memref<3xf32, #tpu.memory_space<smem>>
    %16 = vector.broadcast %15 : f32 to vector<8x128xf32>
    %17 = arith.addf %14, %16 : vector<8x128xf32>
    %18 = arith.negf %17 : vector<8x128xf32>
    %19 = math.exp %18 : vector<8x128xf32>
    %cst_4 = arith.constant 1.000000e+00 : f32
    %20 = vector.broadcast %cst_4 : f32 to vector<8x128xf32>
    %21 = arith.addf %20, %19 : vector<8x128xf32>
    %22 = arith.divf %20, %21 : vector<8x128xf32>
    %c2 = arith.constant 2 : index
    %23 = memref.load %arg1[%c2] : memref<3xf32, #tpu.memory_space<smem>>
    %24 = vector.broadcast %23 : f32 to vector<8x128xf32>
    %25 = arith.mulf %0, %24 : vector<8x128xf32>
    %c2_5 = arith.constant 2 : index
    %26 = memref.load %arg2[%c2_5] : memref<3xf32, #tpu.memory_space<smem>>
    %27 = vector.broadcast %26 : f32 to vector<8x128xf32>
    %28 = arith.addf %25, %27 : vector<8x128xf32>
    %29 = arith.negf %28 : vector<8x128xf32>
    %30 = math.exp %29 : vector<8x128xf32>
    %cst_6 = arith.constant 1.000000e+00 : f32
    %31 = vector.broadcast %cst_6 : f32 to vector<8x128xf32>
    %32 = arith.addf %31, %30 : vector<8x128xf32>
    %33 = arith.divf %31, %32 : vector<8x128xf32>
    %c0_7 = arith.constant 0 : index
    %34 = memref.load %arg3[%c0_7] : memref<15xf32, #tpu.memory_space<smem>>
    %35 = vector.broadcast %34 : f32 to vector<8x128xf32>
    %36 = arith.mulf %11, %35 : vector<8x128xf32>
    %c5 = arith.constant 5 : index
    %37 = memref.load %arg3[%c5] : memref<15xf32, #tpu.memory_space<smem>>
    %38 = vector.broadcast %37 : f32 to vector<8x128xf32>
    %39 = arith.mulf %22, %38 : vector<8x128xf32>
    %40 = arith.addf %36, %39 : vector<8x128xf32>
    %c10 = arith.constant 10 : index
    %41 = memref.load %arg3[%c10] : memref<15xf32, #tpu.memory_space<smem>>
    %42 = vector.broadcast %41 : f32 to vector<8x128xf32>
    %43 = arith.mulf %33, %42 : vector<8x128xf32>
    %44 = arith.addf %40, %43 : vector<8x128xf32>
    %c0_8 = arith.constant 0 : index
    %45 = memref.load %arg4[%c0_8] : memref<5xf32, #tpu.memory_space<smem>>
    %46 = vector.broadcast %45 : f32 to vector<8x128xf32>
    %47 = arith.addf %44, %46 : vector<8x128xf32>
    %48 = arith.negf %47 : vector<8x128xf32>
    %49 = math.exp %48 : vector<8x128xf32>
    %cst_9 = arith.constant 1.000000e+00 : f32
    %50 = vector.broadcast %cst_9 : f32 to vector<8x128xf32>
    %51 = arith.addf %50, %49 : vector<8x128xf32>
    %52 = arith.divf %50, %51 : vector<8x128xf32>
    %c0_10 = arith.constant 0 : index
    %c0_11 = arith.constant 0 : index
    %c0_12 = arith.constant 0 : index
    %53 = vector.load %arg6[%c0_10, %c0_11, %c0_12] : memref<5x8x128xf32, #tpu.memory_space<vmem>>, vector<1x8x128xf32>
    %54 = vector.shape_cast %53 : vector<1x8x128xf32> to vector<8x128xf32>
    %55 = vector.shape_cast %52 : vector<8x128xf32> to vector<1x8x128xf32>
    tpu.vector_store %arg6[%c0_10, %c0_11, %c0_12], %55 {strides = array<i32>} : memref<5x8x128xf32, #tpu.memory_space<vmem>>, vector<1x8x128xf32>,
    %c1_13 = arith.constant 1 : index
    %56 = memref.load %arg3[%c1_13] : memref<15xf32, #tpu.memory_space<smem>>
    %57 = vector.broadcast %56 : f32 to vector<8x128xf32>
    %58 = arith.mulf %11, %57 : vector<8x128xf32>
    %c6 = arith.constant 6 : index
    %59 = memref.load %arg3[%c6] : memref<15xf32, #tpu.memory_space<smem>>
    %60 = vector.broadcast %59 : f32 to vector<8x128xf32>
    %61 = arith.mulf %22, %60 : vector<8x128xf32>
    %62 = arith.addf %58, %61 : vector<8x128xf32>
    %c11 = arith.constant 11 : index
    %63 = memref.load %arg3[%c11] : memref<15xf32, #tpu.memory_space<smem>>
    %64 = vector.broadcast %63 : f32 to vector<8x128xf32>
    %65 = arith.mulf %33, %64 : vector<8x128xf32>
    %66 = arith.addf %62, %65 : vector<8x128xf32>
    %c1_14 = arith.constant 1 : index
    %67 = memref.load %arg4[%c1_14] : memref<5xf32, #tpu.memory_space<smem>>
    %68 = vector.broadcast %67 : f32 to vector<8x128xf32>
    %69 = arith.addf %66, %68 : vector<8x128xf32>
    %70 = arith.negf %69 : vector<8x128xf32>
    %71 = math.exp %70 : vector<8x128xf32>
    %cst_15 = arith.constant 1.000000e+00 : f32
    %72 = vector.broadcast %cst_15 : f32 to vector<8x128xf32>
    %73 = arith.addf %72, %71 : vector<8x128xf32>
    %74 = arith.divf %72, %73 : vector<8x128xf32>
    %c1_16 = arith.constant 1 : index
    %c0_17 = arith.constant 0 : index
    %c0_18 = arith.constant 0 : index
    %75 = vector.load %arg6[%c1_16, %c0_17, %c0_18] : memref<5x8x128xf32, #tpu.memory_space<vmem>>, vector<1x8x128xf32>
    %76 = vector.shape_cast %75 : vector<1x8x128xf32> to vector<8x128xf32>
    %77 = vector.shape_cast %74 : vector<8x128xf32> to vector<1x8x128xf32>
    tpu.vector_store %arg6[%c1_16, %c0_17, %c0_18], %77 {strides = array<i32>} : memref<5x8x128xf32, #tpu.memory_space<vmem>>, vector<1x8x128xf32>,
    %c2_19 = arith.constant 2 : index
    %78 = memref.load %arg3[%c2_19] : memref<15xf32, #tpu.memory_space<smem>>
    %79 = vector.broadcast %78 : f32 to vector<8x128xf32>
    %80 = arith.mulf %11, %79 : vector<8x128xf32>
    %c7 = arith.constant 7 : index
    %81 = memref.load %arg3[%c7] : memref<15xf32, #tpu.memory_space<smem>>
    %82 = vector.broadcast %81 : f32 to vector<8x128xf32>
    %83 = arith.mulf %22, %82 : vector<8x128xf32>
    %84 = arith.addf %80, %83 : vector<8x128xf32>
    %c12 = arith.constant 12 : index
    %85 = memref.load %arg3[%c12] : memref<15xf32, #tpu.memory_space<smem>>
    %86 = vector.broadcast %85 : f32 to vector<8x128xf32>
    %87 = arith.mulf %33, %86 : vector<8x128xf32>
    %88 = arith.addf %84, %87 : vector<8x128xf32>
    %c2_20 = arith.constant 2 : index
    %89 = memref.load %arg4[%c2_20] : memref<5xf32, #tpu.memory_space<smem>>
    %90 = vector.broadcast %89 : f32 to vector<8x128xf32>
    %91 = arith.addf %88, %90 : vector<8x128xf32>
    %92 = arith.negf %91 : vector<8x128xf32>
    %93 = math.exp %92 : vector<8x128xf32>
    %cst_21 = arith.constant 1.000000e+00 : f32
    %94 = vector.broadcast %cst_21 : f32 to vector<8x128xf32>
    %95 = arith.addf %94, %93 : vector<8x128xf32>
    %96 = arith.divf %94, %95 : vector<8x128xf32>
    %c2_22 = arith.constant 2 : index
    %c0_23 = arith.constant 0 : index
    %c0_24 = arith.constant 0 : index
    %97 = vector.load %arg6[%c2_22, %c0_23, %c0_24] : memref<5x8x128xf32, #tpu.memory_space<vmem>>, vector<1x8x128xf32>
    %98 = vector.shape_cast %97 : vector<1x8x128xf32> to vector<8x128xf32>
    %99 = vector.shape_cast %96 : vector<8x128xf32> to vector<1x8x128xf32>
    tpu.vector_store %arg6[%c2_22, %c0_23, %c0_24], %99 {strides = array<i32>} : memref<5x8x128xf32, #tpu.memory_space<vmem>>, vector<1x8x128xf32>,
    %c3 = arith.constant 3 : index
    %100 = memref.load %arg3[%c3] : memref<15xf32, #tpu.memory_space<smem>>
    %101 = vector.broadcast %100 : f32 to vector<8x128xf32>
    %102 = arith.mulf %11, %101 : vector<8x128xf32>
    %c8 = arith.constant 8 : index
    %103 = memref.load %arg3[%c8] : memref<15xf32, #tpu.memory_space<smem>>
    %104 = vector.broadcast %103 : f32 to vector<8x128xf32>
    %105 = arith.mulf %22, %104 : vector<8x128xf32>
    %106 = arith.addf %102, %105 : vector<8x128xf32>
    %c13 = arith.constant 13 : index
    %107 = memref.load %arg3[%c13] : memref<15xf32, #tpu.memory_space<smem>>
    %108 = vector.broadcast %107 : f32 to vector<8x128xf32>
    %109 = arith.mulf %33, %108 : vector<8x128xf32>
    %110 = arith.addf %106, %109 : vector<8x128xf32>
    %c3_25 = arith.constant 3 : index
    %111 = memref.load %arg4[%c3_25] : memref<5xf32, #tpu.memory_space<smem>>
    %112 = vector.broadcast %111 : f32 to vector<8x128xf32>
    %113 = arith.addf %110, %112 : vector<8x128xf32>
    %114 = arith.negf %113 : vector<8x128xf32>
    %115 = math.exp %114 : vector<8x128xf32>
    %cst_26 = arith.constant 1.000000e+00 : f32
    %116 = vector.broadcast %cst_26 : f32 to vector<8x128xf32>
    %117 = arith.addf %116, %115 : vector<8x128xf32>
    %118 = arith.divf %116, %117 : vector<8x128xf32>
    %c3_27 = arith.constant 3 : index
    %c0_28 = arith.constant 0 : index
    %c0_29 = arith.constant 0 : index
    %119 = vector.load %arg6[%c3_27, %c0_28, %c0_29] : memref<5x8x128xf32, #tpu.memory_space<vmem>>, vector<1x8x128xf32>
    %120 = vector.shape_cast %119 : vector<1x8x128xf32> to vector<8x128xf32>
    %121 = vector.shape_cast %118 : vector<8x128xf32> to vector<1x8x128xf32>
    tpu.vector_store %arg6[%c3_27, %c0_28, %c0_29], %121 {strides = array<i32>} : memref<5x8x128xf32, #tpu.memory_space<vmem>>, vector<1x8x128xf32>,
    %c4 = arith.constant 4 : index
    %122 = memref.load %arg3[%c4] : memref<15xf32, #tpu.memory_space<smem>>
    %123 = vector.broadcast %122 : f32 to vector<8x128xf32>
    %124 = arith.mulf %11, %123 : vector<8x128xf32>
    %c9 = arith.constant 9 : index
    %125 = memref.load %arg3[%c9] : memref<15xf32, #tpu.memory_space<smem>>
    %126 = vector.broadcast %125 : f32 to vector<8x128xf32>
    %127 = arith.mulf %22, %126 : vector<8x128xf32>
    %128 = arith.addf %124, %127 : vector<8x128xf32>
    %c14 = arith.constant 14 : index
    %129 = memref.load %arg3[%c14] : memref<15xf32, #tpu.memory_space<smem>>
    %130 = vector.broadcast %129 : f32 to vector<8x128xf32>
    %131 = arith.mulf %33, %130 : vector<8x128xf32>
    %132 = arith.addf %128, %131 : vector<8x128xf32>
    %c4_30 = arith.constant 4 : index
    %133 = memref.load %arg4[%c4_30] : memref<5xf32, #tpu.memory_space<smem>>
    %134 = vector.broadcast %133 : f32 to vector<8x128xf32>
    %135 = arith.addf %132, %134 : vector<8x128xf32>
    %136 = arith.negf %135 : vector<8x128xf32>
    %137 = math.exp %136 : vector<8x128xf32>
    %cst_31 = arith.constant 1.000000e+00 : f32
    %138 = vector.broadcast %cst_31 : f32 to vector<8x128xf32>
    %139 = arith.addf %138, %137 : vector<8x128xf32>
    %140 = arith.divf %138, %139 : vector<8x128xf32>
    %c4_32 = arith.constant 4 : index
    %c0_33 = arith.constant 0 : index
    %c0_34 = arith.constant 0 : index
    %141 = vector.load %arg6[%c4_32, %c0_33, %c0_34] : memref<5x8x128xf32, #tpu.memory_space<vmem>>, vector<1x8x128xf32>
    %142 = vector.shape_cast %141 : vector<1x8x128xf32> to vector<8x128xf32>
    %143 = vector.shape_cast %140 : vector<8x128xf32> to vector<1x8x128xf32>
    tpu.vector_store %arg6[%c4_32, %c0_33, %c0_34], %143 {strides = array<i32>} : memref<5x8x128xf32, #tpu.memory_space<vmem>>, vector<1x8x128xf32>,
    return
  }
  func.func @transform_0(%arg0: i32) -> i32 {
    %c0_i32 = arith.constant 0 : i32
    %c0_i32_0 = arith.constant 0 : i32
    return %c0_i32 : i32
  }
  func.func @transform_1(%arg0: i32) -> i32 {
    %c0_i32 = arith.constant 0 : i32
    %c0_i32_0 = arith.constant 0 : i32
    return %c0_i32 : i32
  }
  func.func @transform_2(%arg0: i32) -> i32 {
    %c0_i32 = arith.constant 0 : i32
    %c0_i32_0 = arith.constant 0 : i32
    return %c0_i32 : i32
  }
  func.func @transform_3(%arg0: i32) -> i32 {
    %c0_i32 = arith.constant 0 : i32
    %c0_i32_0 = arith.constant 0 : i32
    return %c0_i32 : i32
  }
  func.func @transform_4(%arg0: i32) -> (i32, i32) {
    %c0_i32 = arith.constant 0 : i32
    %c0_i32_0 = arith.constant 0 : i32
    return %arg0, %c0_i32 : i32, i32
  }
  func.func @transform_5(%arg0: i32) -> (i32, i32, i32) {
    %c0_i32 = arith.constant 0 : i32
    %c0_i32_0 = arith.constant 0 : i32
    %c0_i32_1 = arith.constant 0 : i32
    return %c0_i32, %arg0, %c0_i32_0 : i32, i32, i32
  }
}

</mosaic_0001>

<llo_original>
// kernel: tpu_custom_call.1
$region0: #{tpu_custom_call.1}
  #allocation0 [shape = 'u32[]', space=smem, size = 0x4, offset = 0x4, fixed_abs, tag = 'smem constant byte address 0x4 - core index']
  #allocation1 [shape = 'u32[144,128]{1,0:T(1,128)}', space=vmem, size = 0x12000, scoped, tag = 'internal scratch']
  %s0 = inlined_call_operand.hbm [shape: f32[3], index: 0, kind: input, shape index: {}]
  %s1 = inlined_call_operand.vmem [shape: f32[3], index: 1, kind: input, shape index: {}]
  %s2 = inlined_call_operand.vmem [shape: f32[15], index: 2, kind: input, shape index: {}]
  %s3 = inlined_call_operand.vmem [shape: f32[5], index: 3, kind: input, shape index: {}]
  %s4 = inlined_call_operand.vmem [shape: f32[8,128], index: 4, kind: input, shape index: {}]
  %s5 = inlined_call_operand.hbm [shape: f32[5,8,128], index: 5, kind: output, shape index: {}]
  %s6 = sld [smem:[#allocation0]]
  $region46: #{tpu_custom_call.1} parent=0
    _
  %s8 = ssub.s32 1, %s6
  %s9 = scalar_select 0, %s8, %s6
  $region1: #{tpu_custom_call.1} parent=0
    #allocation2 [shape = 'u8[512]{0}', space=smem, size = 0x200, scoped, tag = 'input window, operand 0, single buffered']
    #allocation3 [shape = 's32[1]{0}', space=sflag, size = 0x4, scoped, tag = 'scoped memory for tpu_custom_call.1']
    #allocation4 [shape = 's32[1]{0}', space=sflag, size = 0x4, scoped, tag = 'scoped memory for tpu_custom_call.1']
    #allocation5 [shape = 's32[1]{0}', space=sflag, size = 0x4, scoped, tag = 'scoped memory for tpu_custom_call.1']
    #allocation6 [shape = 'u8[512]{0}', space=smem, size = 0x200, scoped, tag = 'input window, operand 1, single buffered']
    #allocation7 [shape = 'u8[512]{0}', space=smem, size = 0x200, scoped, tag = 'input window, operand 2, single buffered']
    #allocation8 [shape = 's32[1]{0}', space=sflag, size = 0x4, scoped, tag = 'scoped memory for tpu_custom_call.1']
    #allocation9 [shape = 'u8[512]{0}', space=smem, size = 0x200, scoped, tag = 'input window, operand 3, single buffered']
    #allocation10 [shape = 'u8[20480]{0}', space=vmem, size = 0x5000, scoped, tag = 'output window, operand 0, single buffered']
    %10 = vsyncpa [#allocation4], 0
    %11 = vsyncpa [#allocation5], 0
    %12 = vsyncpa [#allocation8], 0
    %13 = vsyncpa [#allocation3], 0
    // Predicated region
    $region2: #{tpu_custom_call.1} parent=1 // pred_check
      _
    $region3: #{tpu_custom_call.1} parent=1 // pred_check_branch
      %15 = sbr.rel (0) target = $region5
    $region4: #{tpu_custom_call.1} parent=1 // pred_region
      %s17 = ssub.s32 16, 16
      %18 = vsyncadd [#allocation4], %s17
      %21 = dma.hbm_to_smem %s0, 16, [#allocation2], [#allocation4]
    $region5: #{tpu_custom_call.1} parent=1 // pred_fallthru
      _
    // Predicated region
    $region6: #{tpu_custom_call.1} parent=1 // pred_check
      _
    $region7: #{tpu_custom_call.1} parent=1 // pred_check_branch
      %23 = sbr.rel (0) target = $region9
    $region8: #{tpu_custom_call.1} parent=1 // pred_region
      %s25 = ssub.s32 16, 16
      %26 = vsyncadd [#allocation5], %s25
      %s28 = sshll.u32 %s1, 4
      %s29 = int_to_ptr.vmem [resolvable:$true] %s28
      %31 = dma.vmem_to_smem %s29, 16, [#allocation6], [#allocation5]
    $region9: #{tpu_custom_call.1} parent=1 // pred_fallthru
      _
    // Predicated region
    $region10: #{tpu_custom_call.1} parent=1 // pred_check
      _
    $region11: #{tpu_custom_call.1} parent=1 // pred_check_branch
      %33 = sbr.rel (0) target = $region13
    $region12: #{tpu_custom_call.1} parent=1 // pred_region
      %s35 = ssub.s32 16, 16
      %36 = vsyncadd [#allocation8], %s35
      %s38 = sshll.u32 %s2, 4
      %s39 = int_to_ptr.vmem [resolvable:$true] %s38
      %41 = dma.vmem_to_smem %s39, 16, [#allocation7], [#allocation8]
    $region13: #{tpu_custom_call.1} parent=1 // pred_fallthru
      _
    // Predicated region
    $region14: #{tpu_custom_call.1} parent=1 // pred_check
      _
    $region15: #{tpu_custom_call.1} parent=1 // pred_check_branch
      %43 = sbr.rel (0) target = $region17
    $region16: #{tpu_custom_call.1} parent=1 // pred_region
      %s45 = ssub.s32 16, 16
      %46 = vsyncadd [#allocation8], %s45
      %s48 = sshll.u32 %s3, 4
      %s49 = int_to_ptr.vmem [resolvable:$true] %s48
      %51 = dma.vmem_to_smem %s49, 16, [#allocation9], [#allocation8]
    $region17: #{tpu_custom_call.1} parent=1 // pred_fallthru
      _
    // Predicated region
    $region18: #{tpu_custom_call.1} parent=1 // pred_check
      _
    $region19: #{tpu_custom_call.1} parent=1 // pred_check_branch
      %53 = sbr.rel (0) target = $region21
    $region20: #{tpu_custom_call.1} parent=1 // pred_region
      _
    $region21: #{tpu_custom_call.1} parent=1 // pred_fallthru
      _
    // Predicated region
    $region22: #{tpu_custom_call.1} parent=1 // pred_check
      _
    $region23: #{tpu_custom_call.1} parent=1 // pred_check_branch
      %55 = sbr.rel (0) target = $region25
    $region24: #{tpu_custom_call.1} parent=1 // pred_region
      %56 = dma.done [#allocation4], 16
    $region25: #{tpu_custom_call.1} parent=1 // pred_fallthru
      _
    // Predicated region
    $region26: #{tpu_custom_call.1} parent=1 // pred_check
      _
    $region27: #{tpu_custom_call.1} parent=1 // pred_check_branch
      %58 = sbr.rel (0) target = $region29
    $region28: #{tpu_custom_call.1} parent=1 // pred_region
      %59 = dma.done [#allocation5], 16
    $region29: #{tpu_custom_call.1} parent=1 // pred_fallthru
      _
    // Predicated region
    $region30: #{tpu_custom_call.1} parent=1 // pred_check
      _
    $region31: #{tpu_custom_call.1} parent=1 // pred_check_branch
      %61 = sbr.rel (0) target = $region33
    $region32: #{tpu_custom_call.1} parent=1 // pred_region
      %62 = dma.done [#allocation8], 16
    $region33: #{tpu_custom_call.1} parent=1 // pred_fallthru
      _
    // Predicated region
    $region34: #{tpu_custom_call.1} parent=1 // pred_check
      _
    $region35: #{tpu_custom_call.1} parent=1 // pred_check_branch
      %64 = sbr.rel (0) target = $region37
    $region36: #{tpu_custom_call.1} parent=1 // pred_region
      %65 = dma.done [#allocation8], 16
    $region37: #{tpu_custom_call.1} parent=1 // pred_fallthru
      _
    %66 = sfence
    %v67 = vld [vmem:[%s4] sm:$0xff]
    %s68 = sld [smem:[#allocation2]]
    %v69 = vstv %s68
    %v70 = vmul.f32 %v67, %v69
    %s71 = sld [smem:[#allocation6]]
    %v72 = vstv %s71
    %v73 = vadd.f32 %v70, %v72
    %v74 = vxor.u32 %v73, 2147483648
    %v75 = vmul.f32 %v74, 1.442695
    %v76 = vpow.pop %v75
    %v77 = vadd.f32 %v76, 1.0
    %v78 = vrcp.pop %v77
    %v79 = vmul.f32 1.0, %v78
    %s80 = sld [smem:[#allocation2 + $0x1]]
    %v81 = vstv %s80
    %v82 = vmul.f32 %v67, %v81
    %s83 = sld [smem:[#allocation6 + $0x1]]
    %v84 = vstv %s83
    %v85 = vadd.f32 %v82, %v84
    %v86 = vxor.u32 %v85, 2147483648
    %v87 = vmul.f32 %v86, 1.442695
    %v88 = vpow.pop %v87
    %v89 = vadd.f32 %v88, 1.0
    %v90 = vrcp.pop %v89
    %v91 = vmul.f32 1.0, %v90
    %s92 = sld [smem:[#allocation2 + $0x2]]
    %v93 = vstv %s92
    %v94 = vmul.f32 %v67, %v93
    %s95 = sld [smem:[#allocation6 + $0x2]]
    %v96 = vstv %s95
    %v97 = vadd.f32 %v94, %v96
    %v98 = vxor.u32 %v97, 2147483648
    %v99 = vmul.f32 %v98, 1.442695
    %v100 = vpow.pop %v99
    %v101 = vadd.f32 %v100, 1.0
    %v102 = vrcp.pop %v101
    %v103 = vmul.f32 1.0, %v102
    %s104 = sld [smem:[#allocation7]]
    %v105 = vstv %s104
    %v106 = vmul.f32 %v79, %v105
    %s107 = sld [smem:[#allocation7 + $0x5]]
    %v108 = vstv %s107
    %v109 = vmul.f32 %v91, %v108
    %v110 = vadd.f32 %v106, %v109
    %s111 = sld [smem:[#allocation7 + $0xa]]
    %v112 = vstv %s111
    %v113 = vmul.f32 %v103, %v112
    %v114 = vadd.f32 %v110, %v113
    %s115 = sld [smem:[#allocation9]]
    %v116 = vstv %s115
    %v117 = vadd.f32 %v114, %v116
    %v118 = vxor.u32 %v117, 2147483648
    %v119 = vmul.f32 %v118, 1.442695
    %v120 = vpow.pop %v119
    %v121 = vadd.f32 %v120, 1.0
    %v122 = vrcp.pop %v121
    %v123 = vmul.f32 1.0, %v122
    %124 = vst [vmem:[#allocation10] sm:$0xff] %v123
    %s125 = sld [smem:[#allocation7 + $0x1]]
    %v126 = vstv %s125
    %v127 = vmul.f32 %v79, %v126
    %s128 = sld [smem:[#allocation7 + $0x6]]
    %v129 = vstv %s128
    %v130 = vmul.f32 %v91, %v129
    %v131 = vadd.f32 %v127, %v130
    %s132 = sld [smem:[#allocation7 + $0xb]]
    %v133 = vstv %s132
    %v134 = vmul.f32 %v103, %v133
    %v135 = vadd.f32 %v131, %v134
    %s136 = sld [smem:[#allocation9 + $0x1]]
    %v137 = vstv %s136
    %v138 = vadd.f32 %v135, %v137
    %v139 = vxor.u32 %v138, 2147483648
    %v140 = vmul.f32 %v139, 1.442695
    %v141 = vpow.pop %v140
    %v142 = vadd.f32 %v141, 1.0
    %v143 = vrcp.pop %v142
    %v144 = vmul.f32 1.0, %v143
    %s145 = scalar_lea.vmem [#allocation10], 8
    %146 = vst [vmem:[%s145] sm:$0xff] %v144
    %s147 = sld [smem:[#allocation7 + $0x2]]
    %v148 = vstv %s147
    %v149 = vmul.f32 %v79, %v148
    %s150 = sld [smem:[#allocation7 + $0x7]]
    %v151 = vstv %s150
    %v152 = vmul.f32 %v91, %v151
    %v153 = vadd.f32 %v149, %v152
    %s154 = sld [smem:[#allocation7 + $0xc]]
    %v155 = vstv %s154
    %v156 = vmul.f32 %v103, %v155
    %v157 = vadd.f32 %v153, %v156
    %s158 = sld [smem:[#allocation9 + $0x2]]
    %v159 = vstv %s158
    %v160 = vadd.f32 %v157, %v159
    %v161 = vxor.u32 %v160, 2147483648
    %v162 = vmul.f32 %v161, 1.442695
    %v163 = vpow.pop %v162
    %v164 = vadd.f32 %v163, 1.0
    %v165 = vrcp.pop %v164
    %v166 = vmul.f32 1.0, %v165
    %s167 = scalar_lea.vmem [#allocation10], 16
    %168 = vst [vmem:[%s167] sm:$0xff] %v166
    %s169 = sld [smem:[#allocation7 + $0x3]]
    %v170 = vstv %s169
    %v171 = vmul.f32 %v79, %v170
    %s172 = sld [smem:[#allocation7 + $0x8]]
    %v173 = vstv %s172
    %v174 = vmul.f32 %v91, %v173
    %v175 = vadd.f32 %v171, %v174
    %s176 = sld [smem:[#allocation7 + $0xd]]
    %v177 = vstv %s176
    %v178 = vmul.f32 %v103, %v177
    %v179 = vadd.f32 %v175, %v178
    %s180 = sld [smem:[#allocation9 + $0x3]]
    %v181 = vstv %s180
    %v182 = vadd.f32 %v179, %v181
    %v183 = vxor.u32 %v182, 2147483648
    %v184 = vmul.f32 %v183, 1.442695
    %v185 = vpow.pop %v184
    %v186 = vadd.f32 %v185, 1.0
    %v187 = vrcp.pop %v186
    %v188 = vmul.f32 1.0, %v187
    %s189 = scalar_lea.vmem [#allocation10], 24
    %190 = vst [vmem:[%s189] sm:$0xff] %v188
    %s191 = sld [smem:[#allocation7 + $0x4]]
    %v192 = vstv %s191
    %v193 = vmul.f32 %v79, %v192
    %s194 = sld [smem:[#allocation7 + $0x9]]
    %v195 = vstv %s194
    %v196 = vmul.f32 %v91, %v195
    %v197 = vadd.f32 %v193, %v196
    %s198 = sld [smem:[#allocation7 + $0xe]]
    %v199 = vstv %s198
    %v200 = vmul.f32 %v103, %v199
    %v201 = vadd.f32 %v197, %v200
    %s202 = sld [smem:[#allocation9 + $0x4]]
    %v203 = vstv %s202
    %v204 = vadd.f32 %v201, %v203
    %v205 = vxor.u32 %v204, 2147483648
    %v206 = vmul.f32 %v205, 1.442695
    %v207 = vpow.pop %v206
    %v208 = vadd.f32 %v207, 1.0
    %v209 = vrcp.pop %v208
    %v210 = vmul.f32 1.0, %v209
    %s211 = scalar_lea.vmem [#allocation10], 32
    %212 = vst [vmem:[%s211] sm:$0xff] %v210
    // Predicated region
    $region38: #{tpu_custom_call.1} parent=1 // pred_check
      _
    $region39: #{tpu_custom_call.1} parent=1 // pred_check_branch
      %214 = sbr.rel (0) target = $region41
    $region40: #{tpu_custom_call.1} parent=1 // pred_region
      %s216 = ssub.s32 640, 640
      %217 = vsyncadd [#allocation3], %s216
      %s218 = sshll.u32 [#allocation10], 4
      %s219 = int_to_ptr.vmem [resolvable:$true] %s218
      %224 = dma.vmem_to_hbm [thread:$0]  %s219, 640, %s5, [#allocation3], 128, 128, 8
    $region41: #{tpu_custom_call.1} parent=1 // pred_fallthru
      _
    // Predicated region
    $region42: #{tpu_custom_call.1} parent=1 // pred_check
      _
    $region43: #{tpu_custom_call.1} parent=1 // pred_check_branch
      %226 = sbr.rel (0) target = $region45
    $region44: #{tpu_custom_call.1} parent=1 // pred_region
      %227 = dma.done [#allocation3], 640
    $region45: #{tpu_custom_call.1} parent=1 // pred_fallthru
      _
    %228 = vsyncpa [#allocation3], 1
    %229 = vsyncpa [#allocation4], 1
    %230 = vsyncpa [#allocation5], 1
    %231 = vsyncpa [#allocation8], 1

</llo_original>
